<compile_context>
chip_gen: v6e
topology: v6e:2x2x1
jax: 0.10.0
libtpu: 0.0.40
codegen_flags: <defaults>
</compile_context>

<pallas_src>
import math
from functools import partial

import jax
import jax.numpy as jnp
from jax.experimental import pallas as pl
from jax.experimental.pallas import tpu as pltpu


# ----------------------------------------------------------------------------
# Tap tables (compile-time Python-float immediates — no weight DMA in kernel).
# ----------------------------------------------------------------------------
def make_log_taps(kernel_size: int, sigma: float):
    """Full 2-D LoG tap table (matches the PyTorch buffer exactly)."""
    half = kernel_size // 2
    taps = []
    for y in range(kernel_size):
        row = []
        for x in range(kernel_size):
            xv, yv = x - half, y - half
            r2 = xv * xv + yv * yv
            row.append(
                -1.0
                / (math.pi * sigma ** 4)
                * (1.0 - r2 / (2.0 * sigma ** 2))
                * math.exp(-r2 / (2.0 * sigma ** 2))
            )
        taps.append(tuple(row))
    return tuple(taps)


def make_separable_factors(kernel_size: int, sigma: float):
    """Exact rank-2 factorization: tap[y][x] = c*(b[x]*a[y] + a[x]*b[y])."""
    half = kernel_size // 2
    a, b = [], []
    for i in range(kernel_size):
        t = i - half
        g = math.exp(-(t * t) / (2.0 * sigma ** 2))
        a.append(g)
        b.append((0.5 - (t * t) / (2.0 * sigma ** 2)) * g)
    c = -1.0 / (math.pi * sigma ** 4)
    return tuple(a), tuple(b), c


# ----------------------------------------------------------------------------
# Kernel: separable depthwise LoG over a block of TB planes (planes in lanes).
# ----------------------------------------------------------------------------
def _log_kernel(xp_ref, o_ref, *, ax, bx, cay, cby, K: int, H: int, W: int):
    """xp_ref: (Hp, Wp, TB) zero-padded input block;  o_ref: (H, W, TB).

    Layout: H leading, W sublane, plane in lanes — conv shifts never cross the
    lane axis, so every output store is as lane-dense as P allows.
    """
    half = K // 2

    # The only sublane-realigning loads: K W-shifted slices of the padded block,
    # each reused by BOTH horizontal 1-D passes (dx-shift hoisting for free).
    s = [xp_ref[:, dx:dx + W, :].astype(jnp.float32) for dx in range(K)]

    # Horizontal 1-D passes (a- and b-filtered rows), even-symmetric pairing.
    pairs = [s[i] + s[K - 1 - i] for i in range(half)]
    u_a = ax[half] * s[half]
    u_b = bx[half] * s[half]
    for i in range(half):
        u_a = u_a + ax[i] * pairs[i]
        u_b = u_b + bx[i] * pairs[i]

    # Vertical 1-D pass: slices along the leading (H) axis are pure addressing.
    # c is folded into cay/cby, so no extra final scale is needed.
    acc = cby[half] * u_a[half:half + H] + cay[half] * u_b[half:half + H]
    for i in range(half):
        ua_pair = u_a[i:i + H] + u_a[K - 1 - i:K - 1 - i + H]
        ub_pair = u_b[i:i + H] + u_b[K - 1 - i:K - 1 - i + H]
        acc = acc + cby[i] * ua_pair + cay[i] * ub_pair

    o_ref[...] = acc.astype(o_ref.dtype)


# ----------------------------------------------------------------------------
# Sizing helpers (generation-aware VMEM budget, lane-dense plane blocks).
# ----------------------------------------------------------------------------
def _vmem_capacity_bytes() -> int:
    try:
        info = pltpu.get_tpu_info()
        cap = getattr(info, "vmem_capacity_bytes", None)
        if cap:
            return int(cap)
    except Exception:
        pass
    return 64 * 1024 * 1024  # conservative default (v7x-sized)


def _per_plane_bytes(H: int, W: int, Hp: int, Wp: int) -> int:
    # f32 bytes per plane (lane) per grid step:
    #   double-buffered padded input + double-buffered output
    #   + two horizontal-pass intermediates (Hp, W) + accumulator.
    return 4 * (2 * Hp * Wp + 2 * H * W + 2 * Hp * W + H * W)


def _choose_plane_block(P: int, H: int, W: int, Hp: int, Wp: int, budget: int):
    """Number of planes (lane dim) per grid step, or None -> XLA fallback."""
    per_plane = _per_plane_bytes(H, W, Hp, Wp)
    if P < 128:
        if per_plane * P > budget:
            # TODO(synk): add spatial (H) halo tiling so huge images still fit.
            return None
        # TODO(synk): fold W into the lane dim for small plane counts to avoid
        # lane-sparse masked stores (acceptable at these sizes; stores are few).
        return P
    if per_plane * 128 > budget:
        # TODO(synk): spatial (H) halo tiling for huge images.
        return None
    tb = 128
    # Grow lane-dense blocks while they fit the budget AND we keep >= 4 grid
    # steps so both v7x TensorCores stay busy and the pipeline has fill/drain
    # overlap. Ragged tails are handled by Pallas block masking (per-lane op).
    while tb * 2 <= P and per_plane * tb * 2 <= budget and pl.cdiv(P, tb * 2) >= 4:
        tb *= 2
    return tb


# ----------------------------------------------------------------------------
# Wrapper: NCHW in / NCHW out (PyTorch forward semantics).
# ----------------------------------------------------------------------------
def log_conv2d(x: jnp.ndarray, kernel_size: int, sigma: float) -> jnp.ndarray:
    """Depthwise LoG conv (stride 1, zero pad K//2). x: (N, C, H, W)."""
    N, C, H, W = x.shape
    K = kernel_size
    pad = K // 2
    P = N * C
    Hp, Wp = H + 2 * pad, W + 2 * pad

    capacity = _vmem_capacity_bytes()
    budget = (capacity * 5) // 8                      # ~40 MiB v7x, ~80 MiB v5e/v6e
    vmem_limit = int(min(capacity - (8 << 20), budget + (16 << 20)))

    TB = _choose_plane_block(P, H, W, Hp, Wp, budget)
    if TB is None:
        # Safety valve: minimal block would overflow VMEM -> XLA grouped conv.
        w = jnp.asarray(make_log_taps(K, sigma), jnp.float32)
        w = jnp.broadcast_to(w[None, None, :, :], (C, 1, K, K)).astype(x.dtype)
        return jax.lax.conv_general_dilated(
            x, w, (1, 1), [(pad, pad), (pad, pad)],
            dimension_numbers=("NCHW", "OIHW", "NCHW"),
            feature_group_count=C,
        )

    ax, bx, c = make_separable_factors(K, sigma)
    cay = tuple(c * v for v in ax)
    cby = tuple(c * v for v in bx)

    # One fused HBM pass: NCHW -> planes-last (Hp, Wp, P) with the zero halo
    # applied here (no in-kernel staging copy / VMEM halo scratch).
    # NOTE: a channels-last module boundary would remove both layout passes.
    xt = jnp.transpose(x.reshape(P, H, W), (1, 2, 0))           # (H, W, P)
    xpad = jnp.pad(xt, ((pad, pad), (pad, pad), (0, 0)))        # (Hp, Wp, P)

    grid = (pl.cdiv(P, TB),)
    out_t = pl.pallas_call(
        partial(_log_kernel, ax=ax, bx=bx, cay=cay, cby=cby, K=K, H=H, W=W),
        out_shape=jax.ShapeDtypeStruct((H, W, P), x.dtype),
        grid_spec=pltpu.PrefetchScalarGridSpec(
            num_scalar_prefetch=0,
            grid=grid,
            in_specs=[pl.BlockSpec((Hp, Wp, TB), lambda p: (0, 0, p))],
            out_specs=pl.BlockSpec((H, W, TB), lambda p: (0, 0, p)),
        ),
        compiler_params=pltpu.CompilerParams(
            dimension_semantics=("parallel",),
            vmem_limit_bytes=vmem_limit,
        ),
    )(xpad)

    return jnp.transpose(out_t, (2, 0, 1)).reshape(N, C, H, W)


class LoGPallas:
    """JAX/Pallas equivalent of the PyTorch LoG module's forward pass."""

    def __init__(self, kernel_size=5, sigma=0.65, in_channels=1):
        assert kernel_size % 2 == 1, "Kernel size mag niet even zijn!"
        self.kernel_size = kernel_size
        self.sigma = sigma
        self.in_channels = in_channels

        # Reference weight buffer (identical across channels, as in PyTorch).
        self.taps = make_log_taps(kernel_size, sigma)
        w = jnp.asarray(self.taps, dtype=jnp.float32)  # (K, K)
        self.weight = jnp.broadcast_to(
            w[None, None, :, :], (in_channels, 1, kernel_size, kernel_size)
        )

        # Sanity: the exact separable factorization reproduces the 2-D taps.
        a, b, c = make_separable_factors(kernel_size, sigma)
        for y in range(kernel_size):
            for x in range(kernel_size):
                rec = c * (b[x] * a[y] + a[x] * b[y])
                assert math.isclose(rec, self.taps[y][x], rel_tol=1e-9, abs_tol=1e-12)

        self._fn = jax.jit(
            lambda xx: log_conv2d(xx, self.kernel_size, self.sigma)
        )

    def __call__(self, x):
        return self._fn(x)


def _reference(x, weight_oihw, kernel_size):
    # Pure-JAX reference: grouped conv via lax.conv_general_dilated (full f32).
    C = x.shape[1]
    return jax.lax.conv_general_dilated(
        x,
        weight_oihw,
        window_strides=(1, 1),
        padding=[(kernel_size // 2, kernel_size // 2)] * 2,
        dimension_numbers=("NCHW", "OIHW", "NCHW"),
        feature_group_count=C,
        precision=jax.lax.Precision.HIGHEST,
    )


if __name__ == "__main__":
    key = jax.random.PRNGKey(0)
    N, C, H, W = 2, 4, 16, 16
    x = jax.random.normal(key, (N, C, H, W), dtype=jnp.float32)

    model = LoGPallas(kernel_size=5, sigma=0.65, in_channels=C)
    out = jax.block_until_ready(model(x))

    ref = _reference(x, model.weight, model.kernel_size)
    assert out.shape == (N, C, H, W)
    assert jnp.allclose(out, ref, atol=1e-4, rtol=1e-4), "mismatch vs reference conv"

    print("KERNEL_OK")
</pallas_src>

<mosaic_0001>
module attributes {stable_mosaic.version = 11 : i64} {
  func.func @_log_kernel(%arg0: i32, %arg1: memref<20x20x8xf32, #tpu.memory_space<vmem>>, %arg2: memref<16x16x8xf32, #tpu.memory_space<vmem>>) attributes {dimension_semantics = [#tpu.dimension_semantics<parallel>], iteration_bounds = array<i64: 1>, scalar_prefetch = 0 : i64, scratch_operands = 0 : i64, tpu.core_type = #tpu.core_type<tc>, window_params = [{transform_indices = @transform_0, window_bounds = array<i64: 20, 20, 8>}, {transform_indices = @transform_1, window_bounds = array<i64: 16, 16, 8>}]} {
    %c0 = arith.constant 0 : index
    %c0_0 = arith.constant 0 : index
    %c0_1 = arith.constant 0 : index
    %0 = vector.load %arg1[%c0, %c0_0, %c0_1] : memref<20x20x8xf32, #tpu.memory_space<vmem>>, vector<20x16x8xf32>
    %c0_2 = arith.constant 0 : index
    %c1 = arith.constant 1 : index
    %c0_3 = arith.constant 0 : index
    %1 = vector.load %arg1[%c0_2, %c1, %c0_3] : memref<20x20x8xf32, #tpu.memory_space<vmem>>, vector<20x16x8xf32>
    %c0_4 = arith.constant 0 : index
    %c2 = arith.constant 2 : index
    %c0_5 = arith.constant 0 : index
    %2 = vector.load %arg1[%c0_4, %c2, %c0_5] : memref<20x20x8xf32, #tpu.memory_space<vmem>>, vector<20x16x8xf32>
    %c0_6 = arith.constant 0 : index
    %c3 = arith.constant 3 : index
    %c0_7 = arith.constant 0 : index
    %3 = vector.load %arg1[%c0_6, %c3, %c0_7] : memref<20x20x8xf32, #tpu.memory_space<vmem>>, vector<20x16x8xf32>
    %c0_8 = arith.constant 0 : index
    %c4 = arith.constant 4 : index
    %c0_9 = arith.constant 0 : index
    %4 = vector.load %arg1[%c0_8, %c4, %c0_9] : memref<20x20x8xf32, #tpu.memory_space<vmem>>, vector<20x16x8xf32>
    %5 = arith.addf %0, %4 : vector<20x16x8xf32>
    %6 = arith.addf %1, %3 : vector<20x16x8xf32>
    %cst = arith.constant 1.000000e+00 : f32
    %7 = vector.broadcast %cst : f32 to vector<20x16x8xf32>
    %8 = arith.mulf %7, %2 : vector<20x16x8xf32>
    %cst_10 = arith.constant 5.000000e-01 : f32
    %9 = vector.broadcast %cst_10 : f32 to vector<20x16x8xf32>
    %10 = arith.mulf %9, %2 : vector<20x16x8xf32>
    %cst_11 = arith.constant 0.00879362877 : f32
    %11 = vector.broadcast %cst_11 : f32 to vector<20x16x8xf32>
    %12 = arith.mulf %11, %5 : vector<20x16x8xf32>
    %13 = arith.addf %8, %12 : vector<20x16x8xf32>
    %cst_12 = arith.constant -0.0372298323 : f32
    %14 = vector.broadcast %cst_12 : f32 to vector<20x16x8xf32>
    %15 = arith.mulf %14, %5 : vector<20x16x8xf32>
    %16 = arith.addf %10, %15 : vector<20x16x8xf32>
    %cst_13 = arith.constant 3.062260e-01 : f32
    %17 = vector.broadcast %cst_13 : f32 to vector<20x16x8xf32>
    %18 = arith.mulf %17, %6 : vector<20x16x8xf32>
    %19 = arith.addf %13, %18 : vector<20x16x8xf32>
    %cst_14 = arith.constant -0.209284618 : f32
    %20 = vector.broadcast %cst_14 : f32 to vector<20x16x8xf32>
    %21 = arith.mulf %20, %6 : vector<20x16x8xf32>
    %22 = arith.addf %16, %21 : vector<20x16x8xf32>
    %23 = vector.extract_strided_slice %19 {offsets = [2, 0, 0], sizes = [16, 16, 8], strides = [1, 1, 1]} : vector<20x16x8xf32> to vector<16x16x8xf32>
    %cst_15 = arith.constant -0.891593098 : f32
    %24 = vector.broadcast %cst_15 : f32 to vector<16x16x8xf32>
    %25 = arith.mulf %24, %23 : vector<16x16x8xf32>
    %26 = vector.extract_strided_slice %22 {offsets = [2, 0, 0], sizes = [16, 16, 8], strides = [1, 1, 1]} : vector<20x16x8xf32> to vector<16x16x8xf32>
    %cst_16 = arith.constant -1.7831862 : f32
    %27 = vector.broadcast %cst_16 : f32 to vector<16x16x8xf32>
    %28 = arith.mulf %27, %26 : vector<16x16x8xf32>
    %29 = arith.addf %25, %28 : vector<16x16x8xf32>
    %30 = vector.extract_strided_slice %19 {offsets = [0, 0, 0], sizes = [16, 16, 8], strides = [1, 1, 1]} : vector<20x16x8xf32> to vector<16x16x8xf32>
    %31 = vector.extract_strided_slice %19 {offsets = [4, 0, 0], sizes = [16, 16, 8], strides = [1, 1, 1]} : vector<20x16x8xf32> to vector<16x16x8xf32>
    %32 = arith.addf %30, %31 : vector<16x16x8xf32>
    %33 = vector.extract_strided_slice %22 {offsets = [0, 0, 0], sizes = [16, 16, 8], strides = [1, 1, 1]} : vector<20x16x8xf32> to vector<16x16x8xf32>
    %34 = vector.extract_strided_slice %22 {offsets = [4, 0, 0], sizes = [16, 16, 8], strides = [1, 1, 1]} : vector<20x16x8xf32> to vector<16x16x8xf32>
    %35 = arith.addf %33, %34 : vector<16x16x8xf32>
    %cst_17 = arith.constant 0.0663877204 : f32
    %36 = vector.broadcast %cst_17 : f32 to vector<16x16x8xf32>
    %37 = arith.mulf %36, %32 : vector<16x16x8xf32>
    %38 = arith.addf %29, %37 : vector<16x16x8xf32>
    %cst_18 = arith.constant -0.0156806782 : f32
    %39 = vector.broadcast %cst_18 : f32 to vector<16x16x8xf32>
    %40 = arith.mulf %39, %35 : vector<16x16x8xf32>
    %41 = arith.addf %38, %40 : vector<16x16x8xf32>
    %42 = vector.extract_strided_slice %19 {offsets = [1, 0, 0], sizes = [16, 16, 8], strides = [1, 1, 1]} : vector<20x16x8xf32> to vector<16x16x8xf32>
    %43 = vector.extract_strided_slice %19 {offsets = [3, 0, 0], sizes = [16, 16, 8], strides = [1, 1, 1]} : vector<20x16x8xf32> to vector<16x16x8xf32>
    %44 = arith.addf %42, %43 : vector<16x16x8xf32>
    %45 = vector.extract_strided_slice %22 {offsets = [1, 0, 0], sizes = [16, 16, 8], strides = [1, 1, 1]} : vector<20x16x8xf32> to vector<16x16x8xf32>
    %46 = vector.extract_strided_slice %22 {offsets = [3, 0, 0], sizes = [16, 16, 8], strides = [1, 1, 1]} : vector<20x16x8xf32> to vector<16x16x8xf32>
    %47 = arith.addf %45, %46 : vector<16x16x8xf32>
    %cst_19 = arith.constant 0.373193443 : f32
    %48 = vector.broadcast %cst_19 : f32 to vector<16x16x8xf32>
    %49 = arith.mulf %48, %44 : vector<16x16x8xf32>
    %50 = arith.addf %41, %49 : vector<16x16x8xf32>
    %cst_20 = arith.constant -0.54605794 : f32
    %51 = vector.broadcast %cst_20 : f32 to vector<16x16x8xf32>
    %52 = arith.mulf %51, %47 : vector<16x16x8xf32>
    %53 = arith.addf %50, %52 : vector<16x16x8xf32>
    %c0_21 = arith.constant 0 : index
    %c0_22 = arith.constant 0 : index
    %c0_23 = arith.constant 0 : index
    %54 = vector.load %arg2[%c0_21, %c0_22, %c0_23] : memref<16x16x8xf32, #tpu.memory_space<vmem>>, vector<16x16x8xf32>
    tpu.vector_store %arg2[%c0_21, %c0_22, %c0_23], %53 {strides = array<i32>} : memref<16x16x8xf32, #tpu.memory_space<vmem>>, vector<16x16x8xf32>,
    return
  }
  func.func @transform_0(%arg0: i32) -> (i32, i32, i32) {
    %c0_i32 = arith.constant 0 : i32
    %c0_i32_0 = arith.constant 0 : i32
    %c0_i32_1 = arith.constant 0 : i32
    return %c0_i32, %c0_i32_0, %arg0 : i32, i32, i32
  }
  func.func @transform_1(%arg0: i32) -> (i32, i32, i32) {
    %c0_i32 = arith.constant 0 : i32
    %c0_i32_0 = arith.constant 0 : i32
    %c0_i32_1 = arith.constant 0 : i32
    return %c0_i32, %c0_i32_0, %arg0 : i32, i32, i32
  }
}

</mosaic_0001>

<llo_original>
// kernel: _lambda_.1
$region0: #{_lambda_.1}
  #allocation0 [shape = 'u32[]', space=smem, size = 0x4, offset = 0x4, fixed_abs, tag = 'smem constant byte address 0x4 - core index']
  #allocation1 [shape = 'u32[144,128]{1,0:T(1,128)}', space=vmem, size = 0x12000, scoped, tag = 'internal scratch']
  %s0 = inlined_call_operand.vmem [shape: f32[20,20,8], index: 0, kind: input, shape index: {}]
  %s1 = inlined_call_operand.vmem [shape: f32[16,16,8], index: 1, kind: output, shape index: {}]
  %s2 = sld [smem:[#allocation0]]
  $region14: #{_lambda_.1} parent=0
    _
  %s4 = ssub.s32 1, %s2
  %s5 = scalar_select 0, %s4, %s2
  // Predicated region
  $region2: #{_lambda_.1} parent=0 // pred_check
    _
  $region3: #{_lambda_.1} parent=0 // pred_check_branch
    %7 = sbr.rel (0) target = $region5
  $region4: #{_lambda_.1} parent=0 // pred_region
    _
  $region5: #{_lambda_.1} parent=0 // pred_fallthru
    _
  %v8 = vld [vmem:[%s0] sm:$0xff]
  %v9 = vld [vmem:[%s0 + $0x8] sm:$0xff]
  %v10 = vld [vmem:[%s0 + $0x18] sm:$0xff]
  %v11 = vld [vmem:[%s0 + $0x20] sm:$0xff]
  %v12 = vld [vmem:[%s0 + $0x30] sm:$0xff]
  %v13 = vld [vmem:[%s0 + $0x38] sm:$0xff]
  %v14 = vld [vmem:[%s0 + $0x48] sm:$0xff]
  %v15 = vld [vmem:[%s0 + $0x50] sm:$0xff]
  %v16 = vld [vmem:[%s0 + $0x60] sm:$0xff]
  %v17 = vld [vmem:[%s0 + $0x68] sm:$0xff]
  %v18 = vld [vmem:[%s0 + $0x78] sm:$0xff]
  %v19 = vld [vmem:[%s0 + $0x80] sm:$0xff]
  %v20 = vld [vmem:[%s0 + $0x90] sm:$0xff]
  %v21 = vld [vmem:[%s0 + $0x98] sm:$0xff]
  %v22 = vld [vmem:[%s0 + $0xa8] sm:$0xff]
  %v23 = vld [vmem:[%s0 + $0xb0] sm:$0xff]
  %v24 = vld [vmem:[%s0 + $0xc0] sm:$0xff]
  %v25 = vld [vmem:[%s0 + $0xc8] sm:$0xff]
  %v26 = vld [vmem:[%s0 + $0xd8] sm:$0xff]
  %v27 = vld [vmem:[%s0 + $0xe0] sm:$0xff]
  %v28 = vld [vmem:[%s0 + $0xf0] sm:$0xff]
  %v29 = vld [vmem:[%s0 + $0xf8] sm:$0xff]
  %v30 = vld [vmem:[%s0 + $0x108] sm:$0xff]
  %v31 = vld [vmem:[%s0 + $0x110] sm:$0xff]
  %v32 = vld [vmem:[%s0 + $0x120] sm:$0xff]
  %v33 = vld [vmem:[%s0 + $0x128] sm:$0xff]
  %v34 = vld [vmem:[%s0 + $0x138] sm:$0xff]
  %v35 = vld [vmem:[%s0 + $0x140] sm:$0xff]
  %v36 = vld [vmem:[%s0 + $0x150] sm:$0xff]
  %v37 = vld [vmem:[%s0 + $0x158] sm:$0xff]
  %v38 = vld [vmem:[%s0 + $0x168] sm:$0xff]
  %v39 = vld [vmem:[%s0 + $0x170] sm:$0xff]
  %v40 = vld [vmem:[%s0 + $0x180] sm:$0xff]
  %v41 = vld [vmem:[%s0 + $0x188] sm:$0xff]
  %v42 = vld [vmem:[%s0 + $0x198] sm:$0xff]
  %v43 = vld [vmem:[%s0 + $0x1a0] sm:$0xff]
  %v44 = vld [vmem:[%s0 + $0x1b0] sm:$0xff]
  %v45 = vld [vmem:[%s0 + $0x1b8] sm:$0xff]
  %v46 = vld [vmem:[%s0 + $0x1c8] sm:$0xff]
  %v47 = vld [vmem:[%s0 + $0x1d0] sm:$0xff]
  %v48 = vld [vmem:[%s0 + $0x1] sm:$0xff]
  %v49 = vld [vmem:[%s0 + $0x9] sm:$0xff]
  %v50 = vld [vmem:[%s0 + $0x19] sm:$0xff]
  %v51 = vld [vmem:[%s0 + $0x21] sm:$0xff]
  %v52 = vld [vmem:[%s0 + $0x31] sm:$0xff]
  %v53 = vld [vmem:[%s0 + $0x39] sm:$0xff]
  %v54 = vld [vmem:[%s0 + $0x49] sm:$0xff]
  %v55 = vld [vmem:[%s0 + $0x51] sm:$0xff]
  %v56 = vld [vmem:[%s0 + $0x61] sm:$0xff]
  %v57 = vld [vmem:[%s0 + $0x69] sm:$0xff]
  %v58 = vld [vmem:[%s0 + $0x79] sm:$0xff]
  %v59 = vld [vmem:[%s0 + $0x81] sm:$0xff]
  %v60 = vld [vmem:[%s0 + $0x91] sm:$0xff]
  %v61 = vld [vmem:[%s0 + $0x99] sm:$0xff]
  %v62 = vld [vmem:[%s0 + $0xa9] sm:$0xff]
  %v63 = vld [vmem:[%s0 + $0xb1] sm:$0xff]
  %v64 = vld [vmem:[%s0 + $0xc1] sm:$0xff]
  %v65 = vld [vmem:[%s0 + $0xc9] sm:$0xff]
  %v66 = vld [vmem:[%s0 + $0xd9] sm:$0xff]
  %v67 = vld [vmem:[%s0 + $0xe1] sm:$0xff]
  %v68 = vld [vmem:[%s0 + $0xf1] sm:$0xff]
  %v69 = vld [vmem:[%s0 + $0xf9] sm:$0xff]
  %v70 = vld [vmem:[%s0 + $0x109] sm:$0xff]
  %v71 = vld [vmem:[%s0 + $0x111] sm:$0xff]
  %v72 = vld [vmem:[%s0 + $0x121] sm:$0xff]
  %v73 = vld [vmem:[%s0 + $0x129] sm:$0xff]
  %v74 = vld [vmem:[%s0 + $0x139] sm:$0xff]
  %v75 = vld [vmem:[%s0 + $0x141] sm:$0xff]
  %v76 = vld [vmem:[%s0 + $0x151] sm:$0xff]
  %v77 = vld [vmem:[%s0 + $0x159] sm:$0xff]
  %v78 = vld [vmem:[%s0 + $0x169] sm:$0xff]
  %v79 = vld [vmem:[%s0 + $0x171] sm:$0xff]
  %v80 = vld [vmem:[%s0 + $0x181] sm:$0xff]
  %v81 = vld [vmem:[%s0 + $0x189] sm:$0xff]
  %v82 = vld [vmem:[%s0 + $0x199] sm:$0xff]
  %v83 = vld [vmem:[%s0 + $0x1a1] sm:$0xff]
  %v84 = vld [vmem:[%s0 + $0x1b1] sm:$0xff]
  %v85 = vld [vmem:[%s0 + $0x1b9] sm:$0xff]
  %v86 = vld [vmem:[%s0 + $0x1c9] sm:$0xff]
  %v87 = vld [vmem:[%s0 + $0x1d1] sm:$0xff]
  %v88 = vld [vmem:[%s0 + $0x2] sm:$0xff]
  %v89 = vld [vmem:[%s0 + $0xa] sm:$0xff]
  %v90 = vld [vmem:[%s0 + $0x1a] sm:$0xff]
  %v91 = vld [vmem:[%s0 + $0x22] sm:$0xff]
  %v92 = vld [vmem:[%s0 + $0x32] sm:$0xff]
  %v93 = vld [vmem:[%s0 + $0x3a] sm:$0xff]
  %v94 = vld [vmem:[%s0 + $0x4a] sm:$0xff]
  %v95 = vld [vmem:[%s0 + $0x52] sm:$0xff]
  %v96 = vld [vmem:[%s0 + $0x62] sm:$0xff]
  %v97 = vld [vmem:[%s0 + $0x6a] sm:$0xff]
  %v98 = vld [vmem:[%s0 + $0x7a] sm:$0xff]
  %v99 = vld [vmem:[%s0 + $0x82] sm:$0xff]
  %v100 = vld [vmem:[%s0 + $0x92] sm:$0xff]
  %v101 = vld [vmem:[%s0 + $0x9a] sm:$0xff]
  %v102 = vld [vmem:[%s0 + $0xaa] sm:$0xff]
  %v103 = vld [vmem:[%s0 + $0xb2] sm:$0xff]
  %v104 = vld [vmem:[%s0 + $0xc2] sm:$0xff]
  %v105 = vld [vmem:[%s0 + $0xca] sm:$0xff]
  %v106 = vld [vmem:[%s0 + $0xda] sm:$0xff]
  %v107 = vld [vmem:[%s0 + $0xe2] sm:$0xff]
  %v108 = vld [vmem:[%s0 + $0xf2] sm:$0xff]
  %v109 = vld [vmem:[%s0 + $0xfa] sm:$0xff]
  %v110 = vld [vmem:[%s0 + $0x10a] sm:$0xff]
  %v111 = vld [vmem:[%s0 + $0x112] sm:$0xff]
  %v112 = vld [vmem:[%s0 + $0x122] sm:$0xff]
  %v113 = vld [vmem:[%s0 + $0x12a] sm:$0xff]
  %v114 = vld [vmem:[%s0 + $0x13a] sm:$0xff]
  %v115 = vld [vmem:[%s0 + $0x142] sm:$0xff]
  %v116 = vld [vmem:[%s0 + $0x152] sm:$0xff]
  %v117 = vld [vmem:[%s0 + $0x15a] sm:$0xff]
  %v118 = vld [vmem:[%s0 + $0x16a] sm:$0xff]
  %v119 = vld [vmem:[%s0 + $0x172] sm:$0xff]
  %v120 = vld [vmem:[%s0 + $0x182] sm:$0xff]
  %v121 = vld [vmem:[%s0 + $0x18a] sm:$0xff]
  %v122 = vld [vmem:[%s0 + $0x19a] sm:$0xff]
  %v123 = vld [vmem:[%s0 + $0x1a2] sm:$0xff]
  %v124 = vld [vmem:[%s0 + $0x1b2] sm:$0xff]
  %v125 = vld [vmem:[%s0 + $0x1ba] sm:$0xff]
  %v126 = vld [vmem:[%s0 + $0x1ca] sm:$0xff]
  %v127 = vld [vmem:[%s0 + $0x1d2] sm:$0xff]
  %v128 = vld [vmem:[%s0 + $0x3] sm:$0xff]
  %v129 = vld [vmem:[%s0 + $0xb] sm:$0xff]
  %v130 = vld [vmem:[%s0 + $0x1b] sm:$0xff]
  %v131 = vld [vmem:[%s0 + $0x23] sm:$0xff]
  %v132 = vld [vmem:[%s0 + $0x33] sm:$0xff]
  %v133 = vld [vmem:[%s0 + $0x3b] sm:$0xff]
  %v134 = vld [vmem:[%s0 + $0x4b] sm:$0xff]
  %v135 = vld [vmem:[%s0 + $0x53] sm:$0xff]
  %v136 = vld [vmem:[%s0 + $0x63] sm:$0xff]
  %v137 = vld [vmem:[%s0 + $0x6b] sm:$0xff]
  %v138 = vld [vmem:[%s0 + $0x7b] sm:$0xff]
  %v139 = vld [vmem:[%s0 + $0x83] sm:$0xff]
  %v140 = vld [vmem:[%s0 + $0x93] sm:$0xff]
  %v141 = vld [vmem:[%s0 + $0x9b] sm:$0xff]
  %v142 = vld [vmem:[%s0 + $0xab] sm:$0xff]
  %v143 = vld [vmem:[%s0 + $0xb3] sm:$0xff]
  %v144 = vld [vmem:[%s0 + $0xc3] sm:$0xff]
  %v145 = vld [vmem:[%s0 + $0xcb] sm:$0xff]
  %v146 = vld [vmem:[%s0 + $0xdb] sm:$0xff]
  %v147 = vld [vmem:[%s0 + $0xe3] sm:$0xff]
  %v148 = vld [vmem:[%s0 + $0xf3] sm:$0xff]
  %v149 = vld [vmem:[%s0 + $0xfb] sm:$0xff]
  %v150 = vld [vmem:[%s0 + $0x10b] sm:$0xff]
  %v151 = vld [vmem:[%s0 + $0x113] sm:$0xff]
  %v152 = vld [vmem:[%s0 + $0x123] sm:$0xff]
  %v153 = vld [vmem:[%s0 + $0x12b] sm:$0xff]
  %v154 = vld [vmem:[%s0 + $0x13b] sm:$0xff]
  %v155 = vld [vmem:[%s0 + $0x143] sm:$0xff]
  %v156 = vld [vmem:[%s0 + $0x153] sm:$0xff]
  %v157 = vld [vmem:[%s0 + $0x15b] sm:$0xff]
  %v158 = vld [vmem:[%s0 + $0x16b] sm:$0xff]
  %v159 = vld [vmem:[%s0 + $0x173] sm:$0xff]
  %v160 = vld [vmem:[%s0 + $0x183] sm:$0xff]
  %v161 = vld [vmem:[%s0 + $0x18b] sm:$0xff]
  %v162 = vld [vmem:[%s0 + $0x19b] sm:$0xff]
  %v163 = vld [vmem:[%s0 + $0x1a3] sm:$0xff]
  %v164 = vld [vmem:[%s0 + $0x1b3] sm:$0xff]
  %v165 = vld [vmem:[%s0 + $0x1bb] sm:$0xff]
  %v166 = vld [vmem:[%s0 + $0x1cb] sm:$0xff]
  %v167 = vld [vmem:[%s0 + $0x1d3] sm:$0xff]
  %v168 = vld [vmem:[%s0 + $0x4] sm:$0xff]
  %v169 = vld [vmem:[%s0 + $0xc] sm:$0xff]
  %v170 = vld [vmem:[%s0 + $0x1c] sm:$0xff]
  %v171 = vld [vmem:[%s0 + $0x24] sm:$0xff]
  %v172 = vld [vmem:[%s0 + $0x34] sm:$0xff]
  %v173 = vld [vmem:[%s0 + $0x3c] sm:$0xff]
  %v174 = vld [vmem:[%s0 + $0x4c] sm:$0xff]
  %v175 = vld [vmem:[%s0 + $0x54] sm:$0xff]
  %v176 = vld [vmem:[%s0 + $0x64] sm:$0xff]
  %v177 = vld [vmem:[%s0 + $0x6c] sm:$0xff]
  %v178 = vld [vmem:[%s0 + $0x7c] sm:$0xff]
  %v179 = vld [vmem:[%s0 + $0x84] sm:$0xff]
  %v180 = vld [vmem:[%s0 + $0x94] sm:$0xff]
  %v181 = vld [vmem:[%s0 + $0x9c] sm:$0xff]
  %v182 = vld [vmem:[%s0 + $0xac] sm:$0xff]
  %v183 = vld [vmem:[%s0 + $0xb4] sm:$0xff]
  %v184 = vld [vmem:[%s0 + $0xc4] sm:$0xff]
  %v185 = vld [vmem:[%s0 + $0xcc] sm:$0xff]
  %v186 = vld [vmem:[%s0 + $0xdc] sm:$0xff]
  %v187 = vld [vmem:[%s0 + $0xe4] sm:$0xff]
  %v188 = vld [vmem:[%s0 + $0xf4] sm:$0xff]
  %v189 = vld [vmem:[%s0 + $0xfc] sm:$0xff]
  %v190 = vld [vmem:[%s0 + $0x10c] sm:$0xff]
  %v191 = vld [vmem:[%s0 + $0x114] sm:$0xff]
  %v192 = vld [vmem:[%s0 + $0x124] sm:$0xff]
  %v193 = vld [vmem:[%s0 + $0x12c] sm:$0xff]
  %v194 = vld [vmem:[%s0 + $0x13c] sm:$0xff]
  %v195 = vld [vmem:[%s0 + $0x144] sm:$0xff]
  %v196 = vld [vmem:[%s0 + $0x154] sm:$0xff]
  %v197 = vld [vmem:[%s0 + $0x15c] sm:$0xff]
  %v198 = vld [vmem:[%s0 + $0x16c] sm:$0xff]
  %v199 = vld [vmem:[%s0 + $0x174] sm:$0xff]
  %v200 = vld [vmem:[%s0 + $0x184] sm:$0xff]
  %v201 = vld [vmem:[%s0 + $0x18c] sm:$0xff]
  %v202 = vld [vmem:[%s0 + $0x19c] sm:$0xff]
  %v203 = vld [vmem:[%s0 + $0x1a4] sm:$0xff]
  %v204 = vld [vmem:[%s0 + $0x1b4] sm:$0xff]
  %v205 = vld [vmem:[%s0 + $0x1bc] sm:$0xff]
  %v206 = vld [vmem:[%s0 + $0x1cc] sm:$0xff]
  %v207 = vld [vmem:[%s0 + $0x1d4] sm:$0xff]
  %v208 = vadd.f32 %v8, %v168
  %v209 = vadd.f32 %v9, %v169
  %v210 = vadd.f32 %v10, %v170
  %v211 = vadd.f32 %v11, %v171
  %v212 = vadd.f32 %v12, %v172
  %v213 = vadd.f32 %v13, %v173
  %v214 = vadd.f32 %v14, %v174
  %v215 = vadd.f32 %v15, %v175
  %v216 = vadd.f32 %v16, %v176
  %v217 = vadd.f32 %v17, %v177
  %v218 = vadd.f32 %v18, %v178
  %v219 = vadd.f32 %v19, %v179
  %v220 = vadd.f32 %v20, %v180
  %v221 = vadd.f32 %v21, %v181
  %v222 = vadd.f32 %v22, %v182
  %v223 = vadd.f32 %v23, %v183
  %v224 = vadd.f32 %v24, %v184
  %v225 = vadd.f32 %v25, %v185
  %v226 = vadd.f32 %v26, %v186
  %v227 = vadd.f32 %v27, %v187
  %v228 = vadd.f32 %v28, %v188
  %v229 = vadd.f32 %v29, %v189
  %v230 = vadd.f32 %v30, %v190
  %v231 = vadd.f32 %v31, %v191
  %v232 = vadd.f32 %v32, %v192
  %v233 = vadd.f32 %v33, %v193
  %v234 = vadd.f32 %v34, %v194
  %v235 = vadd.f32 %v35, %v195
  %v236 = vadd.f32 %v36, %v196
  %v237 = vadd.f32 %v37, %v197
  %v238 = vadd.f32 %v38, %v198
  %v239 = vadd.f32 %v39, %v199
  %v240 = vadd.f32 %v40, %v200
  %v241 = vadd.f32 %v41, %v201
  %v242 = vadd.f32 %v42, %v202
  %v243 = vadd.f32 %v43, %v203
  %v244 = vadd.f32 %v44, %v204
  %v245 = vadd.f32 %v45, %v205
  %v246 = vadd.f32 %v46, %v206
  %v247 = vadd.f32 %v47, %v207
  %v248 = vadd.f32 %v48, %v128
  %v249 = vadd.f32 %v49, %v129
  %v250 = vadd.f32 %v50, %v130
  %v251 = vadd.f32 %v51, %v131
  %v252 = vadd.f32 %v52, %v132
  %v253 = vadd.f32 %v53, %v133
  %v254 = vadd.f32 %v54, %v134
  %v255 = vadd.f32 %v55, %v135
  %v256 = vadd.f32 %v56, %v136
  %v257 = vadd.f32 %v57, %v137
  %v258 = vadd.f32 %v58, %v138
  %v259 = vadd.f32 %v59, %v139
  %v260 = vadd.f32 %v60, %v140
  %v261 = vadd.f32 %v61, %v141
  %v262 = vadd.f32 %v62, %v142
  %v263 = vadd.f32 %v63, %v143
  %v264 = vadd.f32 %v64, %v144
  %v265 = vadd.f32 %v65, %v145
  %v266 = vadd.f32 %v66, %v146
  %v267 = vadd.f32 %v67, %v147
  %v268 = vadd.f32 %v68, %v148
  %v269 = vadd.f32 %v69, %v149
  %v270 = vadd.f32 %v70, %v150
  %v271 = vadd.f32 %v71, %v151
  %v272 = vadd.f32 %v72, %v152
  %v273 = vadd.f32 %v73, %v153
  %v274 = vadd.f32 %v74, %v154
  %v275 = vadd.f32 %v75, %v155
  %v276 = vadd.f32 %v76, %v156
  %v277 = vadd.f32 %v77, %v157
  %v278 = vadd.f32 %v78, %v158
  %v279 = vadd.f32 %v79, %v159
  %v280 = vadd.f32 %v80, %v160
  %v281 = vadd.f32 %v81, %v161
  %v282 = vadd.f32 %v82, %v162
  %v283 = vadd.f32 %v83, %v163
  %v284 = vadd.f32 %v84, %v164
  %v285 = vadd.f32 %v85, %v165
  %v286 = vadd.f32 %v86, %v166
  %v287 = vadd.f32 %v87, %v167
  %v288 = vmul.f32 %v88, 0.5
  %v289 = vmul.f32 %v89, 0.5
  %v290 = vmul.f32 %v90, 0.5
  %v291 = vmul.f32 %v91, 0.5
  %v292 = vmul.f32 %v92, 0.5
  %v293 = vmul.f32 %v93, 0.5
  %v294 = vmul.f32 %v94, 0.5
  %v295 = vmul.f32 %v95, 0.5
  %v296 = vmul.f32 %v96, 0.5
  %v297 = vmul.f32 %v97, 0.5
  %v298 = vmul.f32 %v98, 0.5
  %v299 = vmul.f32 %v99, 0.5
  %v300 = vmul.f32 %v100, 0.5
  %v301 = vmul.f32 %v101, 0.5
  %v302 = vmul.f32 %v102, 0.5
  %v303 = vmul.f32 %v103, 0.5
  %v304 = vmul.f32 %v104, 0.5
  %v305 = vmul.f32 %v105, 0.5
  %v306 = vmul.f32 %v106, 0.5
  %v307 = vmul.f32 %v107, 0.5
  %v308 = vmul.f32 %v108, 0.5
  %v309 = vmul.f32 %v109, 0.5
  %v310 = vmul.f32 %v110, 0.5
  %v311 = vmul.f32 %v111, 0.5
  %v312 = vmul.f32 %v112, 0.5
  %v313 = vmul.f32 %v113, 0.5
  %v314 = vmul.f32 %v114, 0.5
  %v315 = vmul.f32 %v115, 0.5
  %v316 = vmul.f32 %v116, 0.5
  %v317 = vmul.f32 %v117, 0.5
  %v318 = vmul.f32 %v118, 0.5
  %v319 = vmul.f32 %v119, 0.5
  %v320 = vmul.f32 %v120, 0.5
  %v321 = vmul.f32 %v121, 0.5
  %v322 = vmul.f32 %v122, 0.5
  %v323 = vmul.f32 %v123, 0.5
  %v324 = vmul.f32 %v124, 0.5
  %v325 = vmul.f32 %v125, 0.5
  %v326 = vmul.f32 %v126, 0.5
  %v327 = vmul.f32 %v127, 0.5
  %v328 = vmul.f32 %v208, 0.008793629
  %v329 = vmul.f32 %v209, 0.008793629
  %v330 = vmul.f32 %v210, 0.008793629
  %v331 = vmul.f32 %v211, 0.008793629
  %v332 = vmul.f32 %v212, 0.008793629
  %v333 = vmul.f32 %v213, 0.008793629
  %v334 = vmul.f32 %v214, 0.008793629
  %v335 = vmul.f32 %v215, 0.008793629
  %v336 = vmul.f32 %v216, 0.008793629
  %v337 = vmul.f32 %v217, 0.008793629
  %v338 = vmul.f32 %v218, 0.008793629
  %v339 = vmul.f32 %v219, 0.008793629
  %v340 = vmul.f32 %v220, 0.008793629
  %v341 = vmul.f32 %v221, 0.008793629
  %v342 = vmul.f32 %v222, 0.008793629
  %v343 = vmul.f32 %v223, 0.008793629
  %v344 = vmul.f32 %v224, 0.008793629
  %v345 = vmul.f32 %v225, 0.008793629
  %v346 = vmul.f32 %v226, 0.008793629
  %v347 = vmul.f32 %v227, 0.008793629
  %v348 = vmul.f32 %v228, 0.008793629
  %v349 = vmul.f32 %v229, 0.008793629
  %v350 = vmul.f32 %v230, 0.008793629
  %v351 = vmul.f32 %v231, 0.008793629
  %v352 = vmul.f32 %v232, 0.008793629
  %v353 = vmul.f32 %v233, 0.008793629
  %v354 = vmul.f32 %v234, 0.008793629
  %v355 = vmul.f32 %v235, 0.008793629
  %v356 = vmul.f32 %v236, 0.008793629
  %v357 = vmul.f32 %v237, 0.008793629
  %v358 = vmul.f32 %v238, 0.008793629
  %v359 = vmul.f32 %v239, 0.008793629
  %v360 = vmul.f32 %v240, 0.008793629
  %v361 = vmul.f32 %v241, 0.008793629
  %v362 = vmul.f32 %v242, 0.008793629
  %v363 = vmul.f32 %v243, 0.008793629
  %v364 = vmul.f32 %v244, 0.008793629
  %v365 = vmul.f32 %v245, 0.008793629
  %v366 = vmul.f32 %v246, 0.008793629
  %v367 = vmul.f32 %v247, 0.008793629
  %v368 = vadd.f32 %v88, %v328
  %v369 = vadd.f32 %v89, %v329
  %v370 = vadd.f32 %v90, %v330
  %v371 = vadd.f32 %v91, %v331
  %v372 = vadd.f32 %v92, %v332
  %v373 = vadd.f32 %v93, %v333
  %v374 = vadd.f32 %v94, %v334
  %v375 = vadd.f32 %v95, %v335
  %v376 = vadd.f32 %v96, %v336
  %v377 = vadd.f32 %v97, %v337
  %v378 = vadd.f32 %v98, %v338
  %v379 = vadd.f32 %v99, %v339
  %v380 = vadd.f32 %v100, %v340
  %v381 = vadd.f32 %v101, %v341
  %v382 = vadd.f32 %v102, %v342
  %v383 = vadd.f32 %v103, %v343
  %v384 = vadd.f32 %v104, %v344
  %v385 = vadd.f32 %v105, %v345
  %v386 = vadd.f32 %v106, %v346
  %v387 = vadd.f32 %v107, %v347
  %v388 = vadd.f32 %v108, %v348
  %v389 = vadd.f32 %v109, %v349
  %v390 = vadd.f32 %v110, %v350
  %v391 = vadd.f32 %v111, %v351
  %v392 = vadd.f32 %v112, %v352
  %v393 = vadd.f32 %v113, %v353
  %v394 = vadd.f32 %v114, %v354
  %v395 = vadd.f32 %v115, %v355
  %v396 = vadd.f32 %v116, %v356
  %v397 = vadd.f32 %v117, %v357
  %v398 = vadd.f32 %v118, %v358
  %v399 = vadd.f32 %v119, %v359
  %v400 = vadd.f32 %v120, %v360
  %v401 = vadd.f32 %v121, %v361
  %v402 = vadd.f32 %v122, %v362
  %v403 = vadd.f32 %v123, %v363
  %v404 = vadd.f32 %v124, %v364
  %v405 = vadd.f32 %v125, %v365
  %v406 = vadd.f32 %v126, %v366
  %v407 = vadd.f32 %v127, %v367
  %v408 = vmul.f32 %v208, -0.037229832
  %v409 = vmul.f32 %v209, -0.037229832
  %v410 = vmul.f32 %v210, -0.037229832
  %v411 = vmul.f32 %v211, -0.037229832
  %v412 = vmul.f32 %v212, -0.037229832
  %v413 = vmul.f32 %v213, -0.037229832
  %v414 = vmul.f32 %v214, -0.037229832
  %v415 = vmul.f32 %v215, -0.037229832
  %v416 = vmul.f32 %v216, -0.037229832
  %v417 = vmul.f32 %v217, -0.037229832
  %v418 = vmul.f32 %v218, -0.037229832
  %v419 = vmul.f32 %v219, -0.037229832
  %v420 = vmul.f32 %v220, -0.037229832
  %v421 = vmul.f32 %v221, -0.037229832
  %v422 = vmul.f32 %v222, -0.037229832
  %v423 = vmul.f32 %v223, -0.037229832
  %v424 = vmul.f32 %v224, -0.037229832
  %v425 = vmul.f32 %v225, -0.037229832
  %v426 = vmul.f32 %v226, -0.037229832
  %v427 = vmul.f32 %v227, -0.037229832
  %v428 = vmul.f32 %v228, -0.037229832
  %v429 = vmul.f32 %v229, -0.037229832
  %v430 = vmul.f32 %v230, -0.037229832
  %v431 = vmul.f32 %v231, -0.037229832
  %v432 = vmul.f32 %v232, -0.037229832
  %v433 = vmul.f32 %v233, -0.037229832
  %v434 = vmul.f32 %v234, -0.037229832
  %v435 = vmul.f32 %v235, -0.037229832
  %v436 = vmul.f32 %v236, -0.037229832
  %v437 = vmul.f32 %v237, -0.037229832
  %v438 = vmul.f32 %v238, -0.037229832
  %v439 = vmul.f32 %v239, -0.037229832
  %v440 = vmul.f32 %v240, -0.037229832
  %v441 = vmul.f32 %v241, -0.037229832
  %v442 = vmul.f32 %v242, -0.037229832
  %v443 = vmul.f32 %v243, -0.037229832
  %v444 = vmul.f32 %v244, -0.037229832
  %v445 = vmul.f32 %v245, -0.037229832
  %v446 = vmul.f32 %v246, -0.037229832
  %v447 = vmul.f32 %v247, -0.037229832
  %v448 = vadd.f32 %v288, %v408
  %v449 = vadd.f32 %v289, %v409
  %v450 = vadd.f32 %v290, %v410
  %v451 = vadd.f32 %v291, %v411
  %v452 = vadd.f32 %v292, %v412
  %v453 = vadd.f32 %v293, %v413
  %v454 = vadd.f32 %v294, %v414
  %v455 = vadd.f32 %v295, %v415
  %v456 = vadd.f32 %v296, %v416
  %v457 = vadd.f32 %v297, %v417
  %v458 = vadd.f32 %v298, %v418
  %v459 = vadd.f32 %v299, %v419
  %v460 = vadd.f32 %v300, %v420
  %v461 = vadd.f32 %v301, %v421
  %v462 = vadd.f32 %v302, %v422
  %v463 = vadd.f32 %v303, %v423
  %v464 = vadd.f32 %v304, %v424
  %v465 = vadd.f32 %v305, %v425
  %v466 = vadd.f32 %v306, %v426
  %v467 = vadd.f32 %v307, %v427
  %v468 = vadd.f32 %v308, %v428
  %v469 = vadd.f32 %v309, %v429
  %v470 = vadd.f32 %v310, %v430
  %v471 = vadd.f32 %v311, %v431
  %v472 = vadd.f32 %v312, %v432
  %v473 = vadd.f32 %v313, %v433
  %v474 = vadd.f32 %v314, %v434
  %v475 = vadd.f32 %v315, %v435
  %v476 = vadd.f32 %v316, %v436
  %v477 = vadd.f32 %v317, %v437
  %v478 = vadd.f32 %v318, %v438
  %v479 = vadd.f32 %v319, %v439
  %v480 = vadd.f32 %v320, %v440
  %v481 = vadd.f32 %v321, %v441
  %v482 = vadd.f32 %v322, %v442
  %v483 = vadd.f32 %v323, %v443
  %v484 = vadd.f32 %v324, %v444
  %v485 = vadd.f32 %v325, %v445
  %v486 = vadd.f32 %v326, %v446
  %v487 = vadd.f32 %v327, %v447
  %v488 = vmul.f32 %v248, 0.306226
  %v489 = vmul.f32 %v249, 0.306226
  %v490 = vmul.f32 %v250, 0.306226
  %v491 = vmul.f32 %v251, 0.306226
  %v492 = vmul.f32 %v252, 0.306226
  %v493 = vmul.f32 %v253, 0.306226
  %v494 = vmul.f32 %v254, 0.306226
  %v495 = vmul.f32 %v255, 0.306226
  %v496 = vmul.f32 %v256, 0.306226
  %v497 = vmul.f32 %v257, 0.306226
  %v498 = vmul.f32 %v258, 0.306226
  %v499 = vmul.f32 %v259, 0.306226
  %v500 = vmul.f32 %v260, 0.306226
  %v501 = vmul.f32 %v261, 0.306226
  %v502 = vmul.f32 %v262, 0.306226
  %v503 = vmul.f32 %v263, 0.306226
  %v504 = vmul.f32 %v264, 0.306226
  %v505 = vmul.f32 %v265, 0.306226
  %v506 = vmul.f32 %v266, 0.306226
  %v507 = vmul.f32 %v267, 0.306226
  %v508 = vmul.f32 %v268, 0.306226
  %v509 = vmul.f32 %v269, 0.306226
  %v510 = vmul.f32 %v270, 0.306226
  %v511 = vmul.f32 %v271, 0.306226
  %v512 = vmul.f32 %v272, 0.306226
  %v513 = vmul.f32 %v273, 0.306226
  %v514 = vmul.f32 %v274, 0.306226
  %v515 = vmul.f32 %v275, 0.306226
  %v516 = vmul.f32 %v276, 0.306226
  %v517 = vmul.f32 %v277, 0.306226
  %v518 = vmul.f32 %v278, 0.306226
  %v519 = vmul.f32 %v279, 0.306226
  %v520 = vmul.f32 %v280, 0.306226
  %v521 = vmul.f32 %v281, 0.306226
  %v522 = vmul.f32 %v282, 0.306226
  %v523 = vmul.f32 %v283, 0.306226
  %v524 = vmul.f32 %v284, 0.306226
  %v525 = vmul.f32 %v285, 0.306226
  %v526 = vmul.f32 %v286, 0.306226
  %v527 = vmul.f32 %v287, 0.306226
  %v528 = vadd.f32 %v368, %v488
  %v529 = vadd.f32 %v369, %v489
  %v530 = vadd.f32 %v370, %v490
  %v531 = vadd.f32 %v371, %v491
  %v532 = vadd.f32 %v372, %v492
  %v533 = vadd.f32 %v373, %v493
  %v534 = vadd.f32 %v374, %v494
  %v535 = vadd.f32 %v375, %v495
  %v536 = vadd.f32 %v376, %v496
  %v537 = vadd.f32 %v377, %v497
  %v538 = vadd.f32 %v378, %v498
  %v539 = vadd.f32 %v379, %v499
  %v540 = vadd.f32 %v380, %v500
  %v541 = vadd.f32 %v381, %v501
  %v542 = vadd.f32 %v382, %v502
  %v543 = vadd.f32 %v383, %v503
  %v544 = vadd.f32 %v384, %v504
  %v545 = vadd.f32 %v385, %v505
  %v546 = vadd.f32 %v386, %v506
  %v547 = vadd.f32 %v387, %v507
  %v548 = vadd.f32 %v388, %v508
  %v549 = vadd.f32 %v389, %v509
  %v550 = vadd.f32 %v390, %v510
  %v551 = vadd.f32 %v391, %v511
  %v552 = vadd.f32 %v392, %v512
  %v553 = vadd.f32 %v393, %v513
  %v554 = vadd.f32 %v394, %v514
  %v555 = vadd.f32 %v395, %v515
  %v556 = vadd.f32 %v396, %v516
  %v557 = vadd.f32 %v397, %v517
  %v558 = vadd.f32 %v398, %v518
  %v559 = vadd.f32 %v399, %v519
  %v560 = vadd.f32 %v400, %v520
  %v561 = vadd.f32 %v401, %v521
  %v562 = vadd.f32 %v402, %v522
  %v563 = vadd.f32 %v403, %v523
  %v564 = vadd.f32 %v404, %v524
  %v565 = vadd.f32 %v405, %v525
  %v566 = vadd.f32 %v406, %v526
  %v567 = vadd.f32 %v407, %v527
  %v568 = vmul.f32 %v248, -0.20928462
  %v569 = vmul.f32 %v249, -0.20928462
  %v570 = vmul.f32 %v250, -0.20928462
  %v571 = vmul.f32 %v251, -0.20928462
  %v572 = vmul.f32 %v252, -0.20928462
  %v573 = vmul.f32 %v253, -0.20928462
  %v574 = vmul.f32 %v254, -0.20928462
  %v575 = vmul.f32 %v255, -0.20928462
  %v576 = vmul.f32 %v256, -0.20928462
  %v577 = vmul.f32 %v257, -0.20928462
  %v578 = vmul.f32 %v258, -0.20928462
  %v579 = vmul.f32 %v259, -0.20928462
  %v580 = vmul.f32 %v260, -0.20928462
  %v581 = vmul.f32 %v261, -0.20928462
  %v582 = vmul.f32 %v262, -0.20928462
  %v583 = vmul.f32 %v263, -0.20928462
  %v584 = vmul.f32 %v264, -0.20928462
  %v585 = vmul.f32 %v265, -0.20928462
  %v586 = vmul.f32 %v266, -0.20928462
  %v587 = vmul.f32 %v267, -0.20928462
  %v588 = vmul.f32 %v268, -0.20928462
  %v589 = vmul.f32 %v269, -0.20928462
  %v590 = vmul.f32 %v270, -0.20928462
  %v591 = vmul.f32 %v271, -0.20928462
  %v592 = vmul.f32 %v272, -0.20928462
  %v593 = vmul.f32 %v273, -0.20928462
  %v594 = vmul.f32 %v274, -0.20928462
  %v595 = vmul.f32 %v275, -0.20928462
  %v596 = vmul.f32 %v276, -0.20928462
  %v597 = vmul.f32 %v277, -0.20928462
  %v598 = vmul.f32 %v278, -0.20928462
  %v599 = vmul.f32 %v279, -0.20928462
  %v600 = vmul.f32 %v280, -0.20928462
  %v601 = vmul.f32 %v281, -0.20928462
  %v602 = vmul.f32 %v282, -0.20928462
  %v603 = vmul.f32 %v283, -0.20928462
  %v604 = vmul.f32 %v284, -0.20928462
  %v605 = vmul.f32 %v285, -0.20928462
  %v606 = vmul.f32 %v286, -0.20928462
  %v607 = vmul.f32 %v287, -0.20928462
  %v608 = vadd.f32 %v448, %v568
  %v609 = vadd.f32 %v449, %v569
  %v610 = vadd.f32 %v450, %v570
  %v611 = vadd.f32 %v451, %v571
  %v612 = vadd.f32 %v452, %v572
  %v613 = vadd.f32 %v453, %v573
  %v614 = vadd.f32 %v454, %v574
  %v615 = vadd.f32 %v455, %v575
  %v616 = vadd.f32 %v456, %v576
  %v617 = vadd.f32 %v457, %v577
  %v618 = vadd.f32 %v458, %v578
  %v619 = vadd.f32 %v459, %v579
  %v620 = vadd.f32 %v460, %v580
  %v621 = vadd.f32 %v461, %v581
  %v622 = vadd.f32 %v462, %v582
  %v623 = vadd.f32 %v463, %v583
  %v624 = vadd.f32 %v464, %v584
  %v625 = vadd.f32 %v465, %v585
  %v626 = vadd.f32 %v466, %v586
  %v627 = vadd.f32 %v467, %v587
  %v628 = vadd.f32 %v468, %v588
  %v629 = vadd.f32 %v469, %v589
  %v630 = vadd.f32 %v470, %v590
  %v631 = vadd.f32 %v471, %v591
  %v632 = vadd.f32 %v472, %v592
  %v633 = vadd.f32 %v473, %v593
  %v634 = vadd.f32 %v474, %v594
  %v635 = vadd.f32 %v475, %v595
  %v636 = vadd.f32 %v476, %v596
  %v637 = vadd.f32 %v477, %v597
  %v638 = vadd.f32 %v478, %v598
  %v639 = vadd.f32 %v479, %v599
  %v640 = vadd.f32 %v480, %v600
  %v641 = vadd.f32 %v481, %v601
  %v642 = vadd.f32 %v482, %v602
  %v643 = vadd.f32 %v483, %v603
  %v644 = vadd.f32 %v484, %v604
  %v645 = vadd.f32 %v485, %v605
  %v646 = vadd.f32 %v486, %v606
  %v647 = vadd.f32 %v487, %v607
  %v648 = vmul.f32 %v532, -0.8915931
  %v649 = vmul.f32 %v533, -0.8915931
  %v650 = vmul.f32 %v534, -0.8915931
  %v651 = vmul.f32 %v535, -0.8915931
  %v652 = vmul.f32 %v536, -0.8915931
  %v653 = vmul.f32 %v537, -0.8915931
  %v654 = vmul.f32 %v538, -0.8915931
  %v655 = vmul.f32 %v539, -0.8915931
  %v656 = vmul.f32 %v540, -0.8915931
  %v657 = vmul.f32 %v541, -0.8915931
  %v658 = vmul.f32 %v542, -0.8915931
  %v659 = vmul.f32 %v543, -0.8915931
  %v660 = vmul.f32 %v544, -0.8915931
  %v661 = vmul.f32 %v545, -0.8915931
  %v662 = vmul.f32 %v546, -0.8915931
  %v663 = vmul.f32 %v547, -0.8915931
  %v664 = vmul.f32 %v548, -0.8915931
  %v665 = vmul.f32 %v549, -0.8915931
  %v666 = vmul.f32 %v550, -0.8915931
  %v667 = vmul.f32 %v551, -0.8915931
  %v668 = vmul.f32 %v552, -0.8915931
  %v669 = vmul.f32 %v553, -0.8915931
  %v670 = vmul.f32 %v554, -0.8915931
  %v671 = vmul.f32 %v555, -0.8915931
  %v672 = vmul.f32 %v556, -0.8915931
  %v673 = vmul.f32 %v557, -0.8915931
  %v674 = vmul.f32 %v558, -0.8915931
  %v675 = vmul.f32 %v559, -0.8915931
  %v676 = vmul.f32 %v560, -0.8915931
  %v677 = vmul.f32 %v561, -0.8915931
  %v678 = vmul.f32 %v562, -0.8915931
  %v679 = vmul.f32 %v563, -0.8915931
  %v680 = vmul.f32 %v612, -1.7831862
  %v681 = vmul.f32 %v613, -1.7831862
  %v682 = vmul.f32 %v614, -1.7831862
  %v683 = vmul.f32 %v615, -1.7831862
  %v684 = vmul.f32 %v616, -1.7831862
  %v685 = vmul.f32 %v617, -1.7831862
  %v686 = vmul.f32 %v618, -1.7831862
  %v687 = vmul.f32 %v619, -1.7831862
  %v688 = vmul.f32 %v620, -1.7831862
  %v689 = vmul.f32 %v621, -1.7831862
  %v690 = vmul.f32 %v622, -1.7831862
  %v691 = vmul.f32 %v623, -1.7831862
  %v692 = vmul.f32 %v624, -1.7831862
  %v693 = vmul.f32 %v625, -1.7831862
  %v694 = vmul.f32 %v626, -1.7831862
  %v695 = vmul.f32 %v627, -1.7831862
  %v696 = vmul.f32 %v628, -1.7831862
  %v697 = vmul.f32 %v629, -1.7831862
  %v698 = vmul.f32 %v630, -1.7831862
  %v699 = vmul.f32 %v631, -1.7831862
  %v700 = vmul.f32 %v632, -1.7831862
  %v701 = vmul.f32 %v633, -1.7831862
  %v702 = vmul.f32 %v634, -1.7831862
  %v703 = vmul.f32 %v635, -1.7831862
  %v704 = vmul.f32 %v636, -1.7831862
  %v705 = vmul.f32 %v637, -1.7831862
  %v706 = vmul.f32 %v638, -1.7831862
  %v707 = vmul.f32 %v639, -1.7831862
  %v708 = vmul.f32 %v640, -1.7831862
  %v709 = vmul.f32 %v641, -1.7831862
  %v710 = vmul.f32 %v642, -1.7831862
  %v711 = vmul.f32 %v643, -1.7831862
  %v712 = vadd.f32 %v648, %v680
  %v713 = vadd.f32 %v649, %v681
  %v714 = vadd.f32 %v650, %v682
  %v715 = vadd.f32 %v651, %v683
  %v716 = vadd.f32 %v652, %v684
  %v717 = vadd.f32 %v653, %v685
  %v718 = vadd.f32 %v654, %v686
  %v719 = vadd.f32 %v655, %v687
  %v720 = vadd.f32 %v656, %v688
  %v721 = vadd.f32 %v657, %v689
  %v722 = vadd.f32 %v658, %v690
  %v723 = vadd.f32 %v659, %v691
  %v724 = vadd.f32 %v660, %v692
  %v725 = vadd.f32 %v661, %v693
  %v726 = vadd.f32 %v662, %v694
  %v727 = vadd.f32 %v663, %v695
  %v728 = vadd.f32 %v664, %v696
  %v729 = vadd.f32 %v665, %v697
  %v730 = vadd.f32 %v666, %v698
  %v731 = vadd.f32 %v667, %v699
  %v732 = vadd.f32 %v668, %v700
  %v733 = vadd.f32 %v669, %v701
  %v734 = vadd.f32 %v670, %v702
  %v735 = vadd.f32 %v671, %v703
  %v736 = vadd.f32 %v672, %v704
  %v737 = vadd.f32 %v673, %v705
  %v738 = vadd.f32 %v674, %v706
  %v739 = vadd.f32 %v675, %v707
  %v740 = vadd.f32 %v676, %v708
  %v741 = vadd.f32 %v677, %v709
  %v742 = vadd.f32 %v678, %v710
  %v743 = vadd.f32 %v679, %v711
  %v744 = vadd.f32 %v528, %v536
  %v745 = vadd.f32 %v529, %v537
  %v746 = vadd.f32 %v530, %v538
  %v747 = vadd.f32 %v531, %v539
  %v748 = vadd.f32 %v532, %v540
  %v749 = vadd.f32 %v533, %v541
  %v750 = vadd.f32 %v534, %v542
  %v751 = vadd.f32 %v535, %v543
  %v752 = vadd.f32 %v536, %v544
  %v753 = vadd.f32 %v537, %v545
  %v754 = vadd.f32 %v538, %v546
  %v755 = vadd.f32 %v539, %v547
  %v756 = vadd.f32 %v540, %v548
  %v757 = vadd.f32 %v541, %v549
  %v758 = vadd.f32 %v542, %v550
  %v759 = vadd.f32 %v543, %v551
  %v760 = vadd.f32 %v544, %v552
  %v761 = vadd.f32 %v545, %v553
  %v762 = vadd.f32 %v546, %v554
  %v763 = vadd.f32 %v547, %v555
  %v764 = vadd.f32 %v548, %v556
  %v765 = vadd.f32 %v549, %v557
  %v766 = vadd.f32 %v550, %v558
  %v767 = vadd.f32 %v551, %v559
  %v768 = vadd.f32 %v552, %v560
  %v769 = vadd.f32 %v553, %v561
  %v770 = vadd.f32 %v554, %v562
  %v771 = vadd.f32 %v555, %v563
  %v772 = vadd.f32 %v556, %v564
  %v773 = vadd.f32 %v557, %v565
  %v774 = vadd.f32 %v558, %v566
  %v775 = vadd.f32 %v559, %v567
  %v776 = vadd.f32 %v608, %v616
  %v777 = vadd.f32 %v609, %v617
  %v778 = vadd.f32 %v610, %v618
  %v779 = vadd.f32 %v611, %v619
  %v780 = vadd.f32 %v612, %v620
  %v781 = vadd.f32 %v613, %v621
  %v782 = vadd.f32 %v614, %v622
  %v783 = vadd.f32 %v615, %v623
  %v784 = vadd.f32 %v616, %v624
  %v785 = vadd.f32 %v617, %v625
  %v786 = vadd.f32 %v618, %v626
  %v787 = vadd.f32 %v619, %v627
  %v788 = vadd.f32 %v620, %v628
  %v789 = vadd.f32 %v621, %v629
  %v790 = vadd.f32 %v622, %v630
  %v791 = vadd.f32 %v623, %v631
  %v792 = vadd.f32 %v624, %v632
  %v793 = vadd.f32 %v625, %v633
  %v794 = vadd.f32 %v626, %v634
  %v795 = vadd.f32 %v627, %v635
  %v796 = vadd.f32 %v628, %v636
  %v797 = vadd.f32 %v629, %v637
  %v798 = vadd.f32 %v630, %v638
  %v799 = vadd.f32 %v631, %v639
  %v800 = vadd.f32 %v632, %v640
  %v801 = vadd.f32 %v633, %v641
  %v802 = vadd.f32 %v634, %v642
  %v803 = vadd.f32 %v635, %v643
  %v804 = vadd.f32 %v636, %v644
  %v805 = vadd.f32 %v637, %v645
  %v806 = vadd.f32 %v638, %v646
  %v807 = vadd.f32 %v639, %v647
  %v808 = vmul.f32 %v744, 0.06638772
  %v809 = vmul.f32 %v745, 0.06638772
  %v810 = vmul.f32 %v746, 0.06638772
  %v811 = vmul.f32 %v747, 0.06638772
  %v812 = vmul.f32 %v748, 0.06638772
  %v813 = vmul.f32 %v749, 0.06638772
  %v814 = vmul.f32 %v750, 0.06638772
  %v815 = vmul.f32 %v751, 0.06638772
  %v816 = vmul.f32 %v752, 0.06638772
  %v817 = vmul.f32 %v753, 0.06638772
  %v818 = vmul.f32 %v754, 0.06638772
  %v819 = vmul.f32 %v755, 0.06638772
  %v820 = vmul.f32 %v756, 0.06638772
  %v821 = vmul.f32 %v757, 0.06638772
  %v822 = vmul.f32 %v758, 0.06638772
  %v823 = vmul.f32 %v759, 0.06638772
  %v824 = vmul.f32 %v760, 0.06638772
  %v825 = vmul.f32 %v761, 0.06638772
  %v826 = vmul.f32 %v762, 0.06638772
  %v827 = vmul.f32 %v763, 0.06638772
  %v828 = vmul.f32 %v764, 0.06638772
  %v829 = vmul.f32 %v765, 0.06638772
  %v830 = vmul.f32 %v766, 0.06638772
  %v831 = vmul.f32 %v767, 0.06638772
  %v832 = vmul.f32 %v768, 0.06638772
  %v833 = vmul.f32 %v769, 0.06638772
  %v834 = vmul.f32 %v770, 0.06638772
  %v835 = vmul.f32 %v771, 0.06638772
  %v836 = vmul.f32 %v772, 0.06638772
  %v837 = vmul.f32 %v773, 0.06638772
  %v838 = vmul.f32 %v774, 0.06638772
  %v839 = vmul.f32 %v775, 0.06638772
  %v840 = vadd.f32 %v712, %v808
  %v841 = vadd.f32 %v713, %v809
  %v842 = vadd.f32 %v714, %v810
  %v843 = vadd.f32 %v715, %v811
  %v844 = vadd.f32 %v716, %v812
  %v845 = vadd.f32 %v717, %v813
  %v846 = vadd.f32 %v718, %v814
  %v847 = vadd.f32 %v719, %v815
  %v848 = vadd.f32 %v720, %v816
  %v849 = vadd.f32 %v721, %v817
  %v850 = vadd.f32 %v722, %v818
  %v851 = vadd.f32 %v723, %v819
  %v852 = vadd.f32 %v724, %v820
  %v853 = vadd.f32 %v725, %v821
  %v854 = vadd.f32 %v726, %v822
  %v855 = vadd.f32 %v727, %v823
  %v856 = vadd.f32 %v728, %v824
  %v857 = vadd.f32 %v729, %v825
  %v858 = vadd.f32 %v730, %v826
  %v859 = vadd.f32 %v731, %v827
  %v860 = vadd.f32 %v732, %v828
  %v861 = vadd.f32 %v733, %v829
  %v862 = vadd.f32 %v734, %v830
  %v863 = vadd.f32 %v735, %v831
  %v864 = vadd.f32 %v736, %v832
  %v865 = vadd.f32 %v737, %v833
  %v866 = vadd.f32 %v738, %v834
  %v867 = vadd.f32 %v739, %v835
  %v868 = vadd.f32 %v740, %v836
  %v869 = vadd.f32 %v741, %v837
  %v870 = vadd.f32 %v742, %v838
  %v871 = vadd.f32 %v743, %v839
  %v872 = vmul.f32 %v776, -0.015680678
  %v873 = vmul.f32 %v777, -0.015680678
  %v874 = vmul.f32 %v778, -0.015680678
  %v875 = vmul.f32 %v779, -0.015680678
  %v876 = vmul.f32 %v780, -0.015680678
  %v877 = vmul.f32 %v781, -0.015680678
  %v878 = vmul.f32 %v782, -0.015680678
  %v879 = vmul.f32 %v783, -0.015680678
  %v880 = vmul.f32 %v784, -0.015680678
  %v881 = vmul.f32 %v785, -0.015680678
  %v882 = vmul.f32 %v786, -0.015680678
  %v883 = vmul.f32 %v787, -0.015680678
  %v884 = vmul.f32 %v788, -0.015680678
  %v885 = vmul.f32 %v789, -0.015680678
  %v886 = vmul.f32 %v790, -0.015680678
  %v887 = vmul.f32 %v791, -0.015680678
  %v888 = vmul.f32 %v792, -0.015680678
  %v889 = vmul.f32 %v793, -0.015680678
  %v890 = vmul.f32 %v794, -0.015680678
  %v891 = vmul.f32 %v795, -0.015680678
  %v892 = vmul.f32 %v796, -0.015680678
  %v893 = vmul.f32 %v797, -0.015680678
  %v894 = vmul.f32 %v798, -0.015680678
  %v895 = vmul.f32 %v799, -0.015680678
  %v896 = vmul.f32 %v800, -0.015680678
  %v897 = vmul.f32 %v801, -0.015680678
  %v898 = vmul.f32 %v802, -0.015680678
  %v899 = vmul.f32 %v803, -0.015680678
  %v900 = vmul.f32 %v804, -0.015680678
  %v901 = vmul.f32 %v805, -0.015680678
  %v902 = vmul.f32 %v806, -0.015680678
  %v903 = vmul.f32 %v807, -0.015680678
  %v904 = vadd.f32 %v840, %v872
  %v905 = vadd.f32 %v841, %v873
  %v906 = vadd.f32 %v842, %v874
  %v907 = vadd.f32 %v843, %v875
  %v908 = vadd.f32 %v844, %v876
  %v909 = vadd.f32 %v845, %v877
  %v910 = vadd.f32 %v846, %v878
  %v911 = vadd.f32 %v847, %v879
  %v912 = vadd.f32 %v848, %v880
  %v913 = vadd.f32 %v849, %v881
  %v914 = vadd.f32 %v850, %v882
  %v915 = vadd.f32 %v851, %v883
  %v916 = vadd.f32 %v852, %v884
  %v917 = vadd.f32 %v853, %v885
  %v918 = vadd.f32 %v854, %v886
  %v919 = vadd.f32 %v855, %v887
  %v920 = vadd.f32 %v856, %v888
  %v921 = vadd.f32 %v857, %v889
  %v922 = vadd.f32 %v858, %v890
  %v923 = vadd.f32 %v859, %v891
  %v924 = vadd.f32 %v860, %v892
  %v925 = vadd.f32 %v861, %v893
  %v926 = vadd.f32 %v862, %v894
  %v927 = vadd.f32 %v863, %v895
  %v928 = vadd.f32 %v864, %v896
  %v929 = vadd.f32 %v865, %v897
  %v930 = vadd.f32 %v866, %v898
  %v931 = vadd.f32 %v867, %v899
  %v932 = vadd.f32 %v868, %v900
  %v933 = vadd.f32 %v869, %v901
  %v934 = vadd.f32 %v870, %v902
  %v935 = vadd.f32 %v871, %v903
  %v936 = vadd.f32 %v530, %v534
  %v937 = vadd.f32 %v531, %v535
  %v938 = vadd.f32 %v532, %v536
  %v939 = vadd.f32 %v533, %v537
  %v940 = vadd.f32 %v534, %v538
  %v941 = vadd.f32 %v535, %v539
  %v942 = vadd.f32 %v536, %v540
  %v943 = vadd.f32 %v537, %v541
  %v944 = vadd.f32 %v538, %v542
  %v945 = vadd.f32 %v539, %v543
  %v946 = vadd.f32 %v540, %v544
  %v947 = vadd.f32 %v541, %v545
  %v948 = vadd.f32 %v542, %v546
  %v949 = vadd.f32 %v543, %v547
  %v950 = vadd.f32 %v544, %v548
  %v951 = vadd.f32 %v545, %v549
  %v952 = vadd.f32 %v546, %v550
  %v953 = vadd.f32 %v547, %v551
  %v954 = vadd.f32 %v548, %v552
  %v955 = vadd.f32 %v549, %v553
  %v956 = vadd.f32 %v550, %v554
  %v957 = vadd.f32 %v551, %v555
  %v958 = vadd.f32 %v552, %v556
  %v959 = vadd.f32 %v553, %v557
  %v960 = vadd.f32 %v554, %v558
  %v961 = vadd.f32 %v555, %v559
  %v962 = vadd.f32 %v556, %v560
  %v963 = vadd.f32 %v557, %v561
  %v964 = vadd.f32 %v558, %v562
  %v965 = vadd.f32 %v559, %v563
  %v966 = vadd.f32 %v560, %v564
  %v967 = vadd.f32 %v561, %v565
  %v968 = vadd.f32 %v610, %v614
  %v969 = vadd.f32 %v611, %v615
  %v970 = vadd.f32 %v612, %v616
  %v971 = vadd.f32 %v613, %v617
  %v972 = vadd.f32 %v614, %v618
  %v973 = vadd.f32 %v615, %v619
  %v974 = vadd.f32 %v616, %v620
  %v975 = vadd.f32 %v617, %v621
  %v976 = vadd.f32 %v618, %v622
  %v977 = vadd.f32 %v619, %v623
  %v978 = vadd.f32 %v620, %v624
  %v979 = vadd.f32 %v621, %v625
  %v980 = vadd.f32 %v622, %v626
  %v981 = vadd.f32 %v623, %v627
  %v982 = vadd.f32 %v624, %v628
  %v983 = vadd.f32 %v625, %v629
  %v984 = vadd.f32 %v626, %v630
  %v985 = vadd.f32 %v627, %v631
  %v986 = vadd.f32 %v628, %v632
  %v987 = vadd.f32 %v629, %v633
  %v988 = vadd.f32 %v630, %v634
  %v989 = vadd.f32 %v631, %v635
  %v990 = vadd.f32 %v632, %v636
  %v991 = vadd.f32 %v633, %v637
  %v992 = vadd.f32 %v634, %v638
  %v993 = vadd.f32 %v635, %v639
  %v994 = vadd.f32 %v636, %v640
  %v995 = vadd.f32 %v637, %v641
  %v996 = vadd.f32 %v638, %v642
  %v997 = vadd.f32 %v639, %v643
  %v998 = vadd.f32 %v640, %v644
  %v999 = vadd.f32 %v641, %v645
  %v1000 = vmul.f32 %v936, 0.37319344
  %v1001 = vmul.f32 %v937, 0.37319344
  %v1002 = vmul.f32 %v938, 0.37319344
  %v1003 = vmul.f32 %v939, 0.37319344
  %v1004 = vmul.f32 %v940, 0.37319344
  %v1005 = vmul.f32 %v941, 0.37319344
  %v1006 = vmul.f32 %v942, 0.37319344
  %v1007 = vmul.f32 %v943, 0.37319344
  %v1008 = vmul.f32 %v944, 0.37319344
  %v1009 = vmul.f32 %v945, 0.37319344
  %v1010 = vmul.f32 %v946, 0.37319344
  %v1011 = vmul.f32 %v947, 0.37319344
  %v1012 = vmul.f32 %v948, 0.37319344
  %v1013 = vmul.f32 %v949, 0.37319344
  %v1014 = vmul.f32 %v950, 0.37319344
  %v1015 = vmul.f32 %v951, 0.37319344
  %v1016 = vmul.f32 %v952, 0.37319344
  %v1017 = vmul.f32 %v953, 0.37319344
  %v1018 = vmul.f32 %v954, 0.37319344
  %v1019 = vmul.f32 %v955, 0.37319344
  %v1020 = vmul.f32 %v956, 0.37319344
  %v1021 = vmul.f32 %v957, 0.37319344
  %v1022 = vmul.f32 %v958, 0.37319344
  %v1023 = vmul.f32 %v959, 0.37319344
  %v1024 = vmul.f32 %v960, 0.37319344
  %v1025 = vmul.f32 %v961, 0.37319344
  %v1026 = vmul.f32 %v962, 0.37319344
  %v1027 = vmul.f32 %v963, 0.37319344
  %v1028 = vmul.f32 %v964, 0.37319344
  %v1029 = vmul.f32 %v965, 0.37319344
  %v1030 = vmul.f32 %v966, 0.37319344
  %v1031 = vmul.f32 %v967, 0.37319344
  %v1032 = vadd.f32 %v904, %v1000
  %v1033 = vadd.f32 %v905, %v1001
  %v1034 = vadd.f32 %v906, %v1002
  %v1035 = vadd.f32 %v907, %v1003
  %v1036 = vadd.f32 %v908, %v1004
  %v1037 = vadd.f32 %v909, %v1005
  %v1038 = vadd.f32 %v910, %v1006
  %v1039 = vadd.f32 %v911, %v1007
  %v1040 = vadd.f32 %v912, %v1008
  %v1041 = vadd.f32 %v913, %v1009
  %v1042 = vadd.f32 %v914, %v1010
  %v1043 = vadd.f32 %v915, %v1011
  %v1044 = vadd.f32 %v916, %v1012
  %v1045 = vadd.f32 %v917, %v1013
  %v1046 = vadd.f32 %v918, %v1014
  %v1047 = vadd.f32 %v919, %v1015
  %v1048 = vadd.f32 %v920, %v1016
  %v1049 = vadd.f32 %v921, %v1017
  %v1050 = vadd.f32 %v922, %v1018
  %v1051 = vadd.f32 %v923, %v1019
  %v1052 = vadd.f32 %v924, %v1020
  %v1053 = vadd.f32 %v925, %v1021
  %v1054 = vadd.f32 %v926, %v1022
  %v1055 = vadd.f32 %v927, %v1023
  %v1056 = vadd.f32 %v928, %v1024
  %v1057 = vadd.f32 %v929, %v1025
  %v1058 = vadd.f32 %v930, %v1026
  %v1059 = vadd.f32 %v931, %v1027
  %v1060 = vadd.f32 %v932, %v1028
  %v1061 = vadd.f32 %v933, %v1029
  %v1062 = vadd.f32 %v934, %v1030
  %v1063 = vadd.f32 %v935, %v1031
  %v1064 = vmul.f32 %v968, -0.54605794
  %v1065 = vmul.f32 %v969, -0.54605794
  %v1066 = vmul.f32 %v970, -0.54605794
  %v1067 = vmul.f32 %v971, -0.54605794
  %v1068 = vmul.f32 %v972, -0.54605794
  %v1069 = vmul.f32 %v973, -0.54605794
  %v1070 = vmul.f32 %v974, -0.54605794
  %v1071 = vmul.f32 %v975, -0.54605794
  %v1072 = vmul.f32 %v976, -0.54605794
  %v1073 = vmul.f32 %v977, -0.54605794
  %v1074 = vmul.f32 %v978, -0.54605794
  %v1075 = vmul.f32 %v979, -0.54605794
  %v1076 = vmul.f32 %v980, -0.54605794
  %v1077 = vmul.f32 %v981, -0.54605794
  %v1078 = vmul.f32 %v982, -0.54605794
  %v1079 = vmul.f32 %v983, -0.54605794
  %v1080 = vmul.f32 %v984, -0.54605794
  %v1081 = vmul.f32 %v985, -0.54605794
  %v1082 = vmul.f32 %v986, -0.54605794
  %v1083 = vmul.f32 %v987, -0.54605794
  %v1084 = vmul.f32 %v988, -0.54605794
  %v1085 = vmul.f32 %v989, -0.54605794
  %v1086 = vmul.f32 %v990, -0.54605794
  %v1087 = vmul.f32 %v991, -0.54605794
  %v1088 = vmul.f32 %v992, -0.54605794
  %v1089 = vmul.f32 %v993, -0.54605794
  %v1090 = vmul.f32 %v994, -0.54605794
  %v1091 = vmul.f32 %v995, -0.54605794
  %v1092 = vmul.f32 %v996, -0.54605794
  %v1093 = vmul.f32 %v997, -0.54605794
  %v1094 = vmul.f32 %v998, -0.54605794
  %v1095 = vmul.f32 %v999, -0.54605794
  %v1096 = vadd.f32 %v1032, %v1064
  %v1097 = vadd.f32 %v1033, %v1065
  %v1098 = vadd.f32 %v1034, %v1066
  %v1099 = vadd.f32 %v1035, %v1067
  %v1100 = vadd.f32 %v1036, %v1068
  %v1101 = vadd.f32 %v1037, %v1069
  %v1102 = vadd.f32 %v1038, %v1070
  %v1103 = vadd.f32 %v1039, %v1071
  %v1104 = vadd.f32 %v1040, %v1072
  %v1105 = vadd.f32 %v1041, %v1073
  %v1106 = vadd.f32 %v1042, %v1074
  %v1107 = vadd.f32 %v1043, %v1075
  %v1108 = vadd.f32 %v1044, %v1076
  %v1109 = vadd.f32 %v1045, %v1077
  %v1110 = vadd.f32 %v1046, %v1078
  %v1111 = vadd.f32 %v1047, %v1079
  %v1112 = vadd.f32 %v1048, %v1080
  %v1113 = vadd.f32 %v1049, %v1081
  %v1114 = vadd.f32 %v1050, %v1082
  %v1115 = vadd.f32 %v1051, %v1083
  %v1116 = vadd.f32 %v1052, %v1084
  %v1117 = vadd.f32 %v1053, %v1085
  %v1118 = vadd.f32 %v1054, %v1086
  %v1119 = vadd.f32 %v1055, %v1087
  %v1120 = vadd.f32 %v1056, %v1088
  %v1121 = vadd.f32 %v1057, %v1089
  %v1122 = vadd.f32 %v1058, %v1090
  %v1123 = vadd.f32 %v1059, %v1091
  %v1124 = vadd.f32 %v1060, %v1092
  %v1125 = vadd.f32 %v1061, %v1093
  %v1126 = vadd.f32 %v1062, %v1094
  %v1127 = vadd.f32 %v1063, %v1095
  %vm1128 = vcmask 64512
  %1129 = vst.msk [vmem:[%s1] sm:$0xff] %vm1128, %v1096
  %1130 = vst.msk [vmem:[%s1 + $0x8] sm:$0xff] %vm1128, %v1097
  %1131 = vst.msk [vmem:[%s1 + $0x10] sm:$0xff] %vm1128, %v1098
  %1132 = vst.msk [vmem:[%s1 + $0x18] sm:$0xff] %vm1128, %v1099
  %1133 = vst.msk [vmem:[%s1 + $0x20] sm:$0xff] %vm1128, %v1100
  %1134 = vst.msk [vmem:[%s1 + $0x28] sm:$0xff] %vm1128, %v1101
  %1135 = vst.msk [vmem:[%s1 + $0x30] sm:$0xff] %vm1128, %v1102
  %1136 = vst.msk [vmem:[%s1 + $0x38] sm:$0xff] %vm1128, %v1103
  %1137 = vst.msk [vmem:[%s1 + $0x40] sm:$0xff] %vm1128, %v1104
  %1138 = vst.msk [vmem:[%s1 + $0x48] sm:$0xff] %vm1128, %v1105
  %1139 = vst.msk [vmem:[%s1 + $0x50] sm:$0xff] %vm1128, %v1106
  %1140 = vst.msk [vmem:[%s1 + $0x58] sm:$0xff] %vm1128, %v1107
  %1141 = vst.msk [vmem:[%s1 + $0x60] sm:$0xff] %vm1128, %v1108
  %1142 = vst.msk [vmem:[%s1 + $0x68] sm:$0xff] %vm1128, %v1109
  %1143 = vst.msk [vmem:[%s1 + $0x70] sm:$0xff] %vm1128, %v1110
  %1144 = vst.msk [vmem:[%s1 + $0x78] sm:$0xff] %vm1128, %v1111
  %1145 = vst.msk [vmem:[%s1 + $0x80] sm:$0xff] %vm1128, %v1112
  %1146 = vst.msk [vmem:[%s1 + $0x88] sm:$0xff] %vm1128, %v1113
  %1147 = vst.msk [vmem:[%s1 + $0x90] sm:$0xff] %vm1128, %v1114
  %1148 = vst.msk [vmem:[%s1 + $0x98] sm:$0xff] %vm1128, %v1115
  %1149 = vst.msk [vmem:[%s1 + $0xa0] sm:$0xff] %vm1128, %v1116
  %1150 = vst.msk [vmem:[%s1 + $0xa8] sm:$0xff] %vm1128, %v1117
  %1151 = vst.msk [vmem:[%s1 + $0xb0] sm:$0xff] %vm1128, %v1118
  %1152 = vst.msk [vmem:[%s1 + $0xb8] sm:$0xff] %vm1128, %v1119
  %1153 = vst.msk [vmem:[%s1 + $0xc0] sm:$0xff] %vm1128, %v1120
  %1154 = vst.msk [vmem:[%s1 + $0xc8] sm:$0xff] %vm1128, %v1121
  %1155 = vst.msk [vmem:[%s1 + $0xd0] sm:$0xff] %vm1128, %v1122
  %1156 = vst.msk [vmem:[%s1 + $0xd8] sm:$0xff] %vm1128, %v1123
  %1157 = vst.msk [vmem:[%s1 + $0xe0] sm:$0xff] %vm1128, %v1124
  %1158 = vst.msk [vmem:[%s1 + $0xe8] sm:$0xff] %vm1128, %v1125
  %1159 = vst.msk [vmem:[%s1 + $0xf0] sm:$0xff] %vm1128, %v1126
  %1160 = vst.msk [vmem:[%s1 + $0xf8] sm:$0xff] %vm1128, %v1127
  // Predicated region
  $region6: #{_lambda_.1} parent=0 // pred_check
    _
  $region7: #{_lambda_.1} parent=0 // pred_check_branch
    %1162 = sbr.rel (0) target = $region9
  $region8: #{_lambda_.1} parent=0 // pred_region
    _
  $region9: #{_lambda_.1} parent=0 // pred_fallthru
    _
  // Predicated region
  $region10: #{_lambda_.1} parent=0 // pred_check
    _
  $region11: #{_lambda_.1} parent=0 // pred_check_branch
    %1164 = sbr.rel (0) target = $region13
  $region12: #{_lambda_.1} parent=0 // pred_region
    _
  $region13: #{_lambda_.1} parent=0 // pred_fallthru
    _

</llo_original>
